<compile_context>
chip_gen: v5e
topology: v5e:2x2
jax: 0.10.0
libtpu: 0.0.40
codegen_flags: <defaults>
</compile_context>

<pallas_src>
import jax
import jax.numpy as jnp
from jax.experimental import pallas as pl
from jax.experimental.pallas import tpu as pltpu


# ----------------------------------------------------------------------------------
# Kernel: fused folded-BN affine + PReLU on a (tr, ts) tile
#   rows (= flattened batch*channel) on sublanes, spatial on lanes.
# ----------------------------------------------------------------------------------
def _br_kernel(x_ref, p_ref, o_ref):
    x = x_ref[...].astype(p_ref.dtype)     # (tr, ts); no-op cast when dtypes match
    s = p_ref[0]                            # (tr, 1) scale  -> lane-broadcast on VPU
    b = p_ref[1]                            # (tr, 1) bias
    a = p_ref[2]                            # (tr, 1) PReLU slope
    y = x * s + b                           # folded BatchNorm (eval mode)
    o_ref[...] = jnp.where(y >= 0, y, a * y).astype(o_ref.dtype)


# ----------------------------------------------------------------------------------
# Tile selection: byte-budget driven, lane-dense, keeps the grid multi-step.
# ----------------------------------------------------------------------------------
def _divisors(n):
    ds, i = set(), 1
    while i * i <= n:
        if n % i == 0:
            ds.add(i)
            ds.add(n // i)
        i += 1
    return ds


def _choose_tiles(rows, hwp, itemsize, *, hi_bytes=2 << 20, want_steps=8):
    """Pick (tr, ts): block ~<= hi_bytes, lane-dense ts, >=want_steps (or >=2) steps."""
    ts_cands = sorted(128 * d for d in _divisors(hwp // 128))           # hwp % 128 == 0
    tr_cands = sorted({d for d in _divisors(rows) if d % 8 == 0} | {rows})
    best = None
    for ts in ts_cands:
        for tr in tr_cands:
            blk = tr * ts * itemsize
            steps = (rows // tr) * (hwp // ts)
            fits = blk <= hi_bytes
            key = (fits, steps >= want_steps, steps >= 2, blk if fits else -blk)
            if best is None or key > best[0]:
                best = (key, tr, ts)
    return best[1], best[2]


# ----------------------------------------------------------------------------------
# Wrapper: NCHW in, NCHW out (matches nn.BatchNorm2d(eps=1e-3) + nn.PReLU(C), eval)
# ----------------------------------------------------------------------------------
def br_forward(x_nchw, gamma, beta, running_mean, running_var, prelu_w, eps=1e-3):
    B, C, H, W = x_nchw.shape
    HW = H * W
    rows = B * C

    # Compute natively in bf16 on bf16 inputs; otherwise in f32.
    cdtype = x_nchw.dtype if x_nchw.dtype == jnp.bfloat16 else jnp.float32

    # Fold eval-mode BatchNorm into one affine per channel (f32 math for the fold).
    scale = gamma.astype(jnp.float32) / jnp.sqrt(running_var.astype(jnp.float32) + eps)
    bias = beta.astype(jnp.float32) - running_mean.astype(jnp.float32) * scale
    alpha = prelu_w.astype(jnp.float32).reshape(-1)
    if alpha.shape[0] == 1:                      # default scalar nn.PReLU() weight
        alpha = jnp.broadcast_to(alpha, (C,))

    # Pack params into one (3, B*C, 1) array; row index == b*C + c.
    params = jnp.stack([scale, bias, alpha]).astype(cdtype)             # (3, C)
    params = jnp.tile(params[:, None, :], (1, B, 1)).reshape(3, rows, 1)

    # Lane-dense spatial axis: pad H*W up to a multiple of 128 (sliced off after).
    hwp = -(-HW // 128) * 128
    x2 = x_nchw.reshape(rows, HW)
    if hwp != HW:
        x2 = jnp.pad(x2, ((0, 0), (0, hwp - HW)))

    itemsize = jnp.dtype(x_nchw.dtype).itemsize
    tr, ts = _choose_tiles(rows, hwp, itemsize)
    grid = (rows // tr, hwp // ts)               # spatial axis innermost (contiguous DMA)

    # NOTE: input_output_aliases={0: 0} would let the output reuse x's HBM buffer, but
    # is skipped so callers that still hold x are never clobbered.
    out = pl.pallas_call(
        _br_kernel,
        out_shape=jax.ShapeDtypeStruct((rows, hwp), x_nchw.dtype),
        grid=grid,
        in_specs=[pl.BlockSpec((tr, ts), lambda r, s: (r, s)),
                  pl.BlockSpec((3, tr, 1), lambda r, s: (0, r, 0))],
        out_specs=pl.BlockSpec((tr, ts), lambda r, s: (r, s)),
        compiler_params=pltpu.CompilerParams(
            dimension_semantics=("parallel", "parallel"),
            vmem_limit_bytes=32 << 20),
    )(x2, params)

    if hwp != HW:
        out = out[:, :HW]
    return out.reshape(B, C, H, W)


# ----------------------------------------------------------------------------------
def _reference(x, gamma, beta, mean, var, alpha, eps):
    scale = gamma / jnp.sqrt(var + eps)
    bias = beta - mean * scale
    y = x * scale[None, :, None, None] + bias[None, :, None, None]
    return jnp.where(y >= 0, y, alpha[None, :, None, None] * y)


if __name__ == "__main__":
    key = jax.random.PRNGKey(0)
    kx, kg, kb, km, kv, ka, kx2 = jax.random.split(key, 7)

    # Small shapes consistent with the module: batch=2, channels=4, spatial=16x16.
    B, C, H, W = 2, 4, 16, 16
    x = jax.random.normal(kx, (B, C, H, W), jnp.float32)
    gamma = 1.0 + 0.1 * jax.random.normal(kg, (C,), jnp.float32)        # BN weight
    beta = 0.05 * jax.random.normal(kb, (C,), jnp.float32)              # BN bias
    running_mean = 0.05 * jax.random.normal(km, (C,), jnp.float32)
    running_var = 0.9 + 0.2 * jax.random.uniform(kv, (C,), jnp.float32)
    prelu_w = 0.25 + 0.05 * jax.random.normal(ka, (C,), jnp.float32)    # nn.PReLU(C)

    y = br_forward(x, gamma, beta, running_mean, running_var, prelu_w, eps=1e-3)
    jax.block_until_ready(y)

    ref = _reference(x, gamma, beta, running_mean, running_var, prelu_w, 1e-3)
    assert y.shape == (B, C, H, W), y.shape
    assert bool(jnp.all(jnp.isfinite(y)))
    assert bool(jnp.allclose(y, ref, atol=1e-5, rtol=1e-5)), \
        float(jnp.max(jnp.abs(y - ref)))

    # Also exercise the non-128-multiple spatial path (wrapper pad + slice).
    H2, W2 = 7, 7
    x2 = jax.random.normal(kx2, (B, C, H2, W2), jnp.float32)
    y2 = br_forward(x2, gamma, beta, running_mean, running_var, prelu_w, eps=1e-3)
    jax.block_until_ready(y2)
    ref2 = _reference(x2, gamma, beta, running_mean, running_var, prelu_w, 1e-3)
    assert y2.shape == (B, C, H2, W2), y2.shape
    assert bool(jnp.allclose(y2, ref2, atol=1e-5, rtol=1e-5)), \
        float(jnp.max(jnp.abs(y2 - ref2)))

    print("KERNEL_OK")
</pallas_src>

<mosaic_0001>
module attributes {stable_mosaic.version = 11 : i64} {
  func.func @_br_kernel(%arg0: i32, %arg1: i32, %arg2: memref<8x128xf32, #tpu.memory_space<vmem>>, %arg3: memref<3x8x1xf32, #tpu.memory_space<vmem>>, %arg4: memref<8x128xf32, #tpu.memory_space<vmem>>) attributes {dimension_semantics = [#tpu.dimension_semantics<parallel>, #tpu.dimension_semantics<parallel>], iteration_bounds = array<i64: 1, 2>, scalar_prefetch = 0 : i64, scratch_operands = 0 : i64, tpu.core_type = #tpu.core_type<tc>, window_params = [{transform_indices = @transform_0, window_bounds = array<i64: 8, 128>}, {transform_indices = @transform_1, window_bounds = array<i64: 3, 8, 1>}, {transform_indices = @transform_2, window_bounds = array<i64: 8, 128>}]} {
    %c0 = arith.constant 0 : index
    %c0_0 = arith.constant 0 : index
    %0 = vector.load %arg2[%c0, %c0_0] : memref<8x128xf32, #tpu.memory_space<vmem>>, vector<8x128xf32>
    %c0_1 = arith.constant 0 : index
    %c0_2 = arith.constant 0 : index
    %c0_3 = arith.constant 0 : index
    %1 = vector.load %arg3[%c0_1, %c0_2, %c0_3] : memref<3x8x1xf32, #tpu.memory_space<vmem>>, vector<1x8x1xf32>
    %2 = vector.shape_cast %1 : vector<1x8x1xf32> to vector<8x1xf32>
    %c1 = arith.constant 1 : index
    %c0_4 = arith.constant 0 : index
    %c0_5 = arith.constant 0 : index
    %3 = vector.load %arg3[%c1, %c0_4, %c0_5] : memref<3x8x1xf32, #tpu.memory_space<vmem>>, vector<1x8x1xf32>
    %4 = vector.shape_cast %3 : vector<1x8x1xf32> to vector<8x1xf32>
    %c2 = arith.constant 2 : index
    %c0_6 = arith.constant 0 : index
    %c0_7 = arith.constant 0 : index
    %5 = vector.load %arg3[%c2, %c0_6, %c0_7] : memref<3x8x1xf32, #tpu.memory_space<vmem>>, vector<1x8x1xf32>
    %6 = vector.shape_cast %5 : vector<1x8x1xf32> to vector<8x1xf32>
    %7 = vector.broadcast %2 : vector<8x1xf32> to vector<8x128xf32>
    %8 = arith.mulf %0, %7 : vector<8x128xf32>
    %9 = vector.broadcast %4 : vector<8x1xf32> to vector<8x128xf32>
    %10 = arith.addf %8, %9 : vector<8x128xf32>
    %cst = arith.constant 0.000000e+00 : f32
    %11 = vector.broadcast %cst : f32 to vector<8x128xf32>
    %12 = arith.cmpf oge, %10, %11 : vector<8x128xf32>
    %13 = vector.broadcast %6 : vector<8x1xf32> to vector<8x128xf32>
    %14 = arith.mulf %13, %10 : vector<8x128xf32>
    %15 = arith.select %12, %10, %14 : vector<8x128xi1>, vector<8x128xf32>
    %c0_8 = arith.constant 0 : index
    %c0_9 = arith.constant 0 : index
    %16 = vector.load %arg4[%c0_8, %c0_9] : memref<8x128xf32, #tpu.memory_space<vmem>>, vector<8x128xf32>
    tpu.vector_store %arg4[%c0_8, %c0_9], %15 {strides = array<i32>} : memref<8x128xf32, #tpu.memory_space<vmem>>, vector<8x128xf32>,
    return
  }
  func.func @transform_0(%arg0: i32, %arg1: i32) -> (i32, i32) {
    %c0_i32 = arith.constant 0 : i32
    return %arg0, %arg1 : i32, i32
  }
  func.func @transform_1(%arg0: i32, %arg1: i32) -> (i32, i32, i32) {
    %c0_i32 = arith.constant 0 : i32
    %c0_i32_0 = arith.constant 0 : i32
    %c0_i32_1 = arith.constant 0 : i32
    return %c0_i32, %arg0, %c0_i32_0 : i32, i32, i32
  }
  func.func @transform_2(%arg0: i32, %arg1: i32) -> (i32, i32) {
    %c0_i32 = arith.constant 0 : i32
    return %arg0, %arg1 : i32, i32
  }
}

</mosaic_0001>

<llo_original>
// kernel: tpu_custom_call.1
$region0: #{tpu_custom_call.1}
  #allocation0 [shape = 'u32[]', space=smem, size = 0x4, offset = 0x4, fixed_abs, tag = 'smem constant byte address 0x4 - core index']
  #allocation1 [shape = 'u32[72,128]{1,0:T(1,128)}', space=vmem, size = 0x9000, scoped, tag = 'internal scratch']
  %s0 = inlined_call_operand.vmem [shape: f32[8,256], index: 0, kind: input, shape index: {}]
  %s1 = inlined_call_operand.vmem [shape: f32[3,8,1], index: 1, kind: input, shape index: {}]
  %s2 = inlined_call_operand.hbm [shape: f32[8,256], index: 2, kind: output, shape index: {}]
  %s3 = sld [smem:[#allocation0]]
  $region41: #{tpu_custom_call.1} parent=0
    _
  %s5 = ssub.s32 1, %s3
  %s6 = scalar_select 0, %s5, %s3
  $region1: #{tpu_custom_call.1} parent=0
    #allocation2 [shape = 'u8[8192]{0}', space=vmem, size = 0x2000, scoped, tag = 'output window, operand 0']
    #allocation3 [shape = 's32[2]{0}', space=sflag, size = 0x8, scoped, tag = 'scoped memory for tpu_custom_call.1']
    %7 = vsyncpa [#allocation3], 0
    %s8 = scalar_lea.sflag [#allocation3], 1
    %9 = vsyncpa %s8, 0
    loop: start=0, step=1, limit=4
    $region2: #{tpu_custom_call.1} parent=1 // loop_pre_header
      _
    $region3: #{tpu_custom_call.1} parent=1 // loop_header
      %s11 = sphi 0, %s15
      %p12 = scmp.ge.s32.totalorder %s11, 4
      %s18 = sphi 0, %s30
      %s19 = sphi 0, %s26
      %s20 = sphi 0, %s18
      %s21 = sphi 0, %s19
      %s22 = sphi 0, %s20
      %s23 = sphi 0, %s21
      %s35 = sphi 0, %s37
      %s38 = sphi 0, %s35
      %s39 = sphi 0, %s38
      %s55 = sphi 0, %s39
      %s61 = sphi 0, %s63
      %s64 = sphi 0, %s61
      %s65 = sphi 0, %s64
      %s81 = sphi 0, %s65
      %s89 = sphi 0, %s91
      %s92 = sphi 0, %s89
      %s93 = sphi 0, %s92
      %s109 = sphi 0, %s93
    $region4: #{tpu_custom_call.1} parent=1 // loop_header_branch
      %14 = sbr.rel (%p12) target = $region8
    $region5: #{tpu_custom_call.1} parent=1 // loop_body
      %s16 = ssub.s32 %s11, 1
      %s17 = ssub.s32 %s11, 2
      %s24 = sadd.s32 1, %s19
      %p25 = scmp.ge.s32.totalorder %s24, 2
      %s26 = scalar_select %p25, 0, %s24
      %s27 = sadd.s32 1, %s18
      %s28 = scalar_select %p25, %s27, %s18
      %p29 = scmp.ge.s32.totalorder %s28, 1
      %s30 = scalar_select %p29, 0, %s28
      %s31 = ssub.s32 %s18, %s30
      %s32 = ssub.s32 %s19, %s26
      %s33 = sor.u32 %s31, %s32
      %p34 = scmp.eq.s32.totalorder %s33, 0
      %s36 = sadd.s32 %s35, 1
      %s37 = scalar_select %p34, %s35, %s36
      %p40 = pneg %p34
      %p41 = scmp.eq.s32.totalorder %s11, 1
      %p42 = por %p40, %p41
      %p43 = scmp.ne.s32.totalorder %s35, %s38
      %p44 = scmp.eq.s32.totalorder %s11, 0
      %p45 = por %p43, %p44
      %p46 = scmp.ne.s32.totalorder %s35, %s38
      %p47 = scmp.eq.s32.totalorder %s16, 1
      %p48 = por %p46, %p47
      %p49 = scmp.ne.s32.totalorder %s38, %s39
      %p50 = scmp.eq.s32.totalorder %s16, 0
      %p51 = por %p49, %p50
      %p52 = scmp.ne.s32.totalorder %s38, %s39
      %p53 = scmp.eq.s32.totalorder %s17, 1
      %p54 = por %p52, %p53
      %p56 = scmp.ne.s32.totalorder %s39, %s55
      %p57 = scmp.eq.s32.totalorder %s17, 0
      %p58 = por %p56, %p57
      %s59 = ssub.s32 %s18, %s30
      %p60 = scmp.eq.s32.totalorder %s59, 0
      %s62 = sadd.s32 %s61, 1
      %s63 = scalar_select %p60, %s61, %s62
      %p66 = pneg %p60
      %p67 = scmp.eq.s32.totalorder %s11, 1
      %p68 = por %p66, %p67
      %p69 = scmp.ne.s32.totalorder %s61, %s64
      %p70 = scmp.eq.s32.totalorder %s11, 0
      %p71 = por %p69, %p70
      %p72 = scmp.ne.s32.totalorder %s61, %s64
      %p73 = scmp.eq.s32.totalorder %s16, 1
      %p74 = por %p72, %p73
      %p75 = scmp.ne.s32.totalorder %s64, %s65
      %p76 = scmp.eq.s32.totalorder %s16, 0
      %p77 = por %p75, %p76
      %p78 = scmp.ne.s32.totalorder %s64, %s65
      %p79 = scmp.eq.s32.totalorder %s17, 1
      %p80 = por %p78, %p79
      %p82 = scmp.ne.s32.totalorder %s65, %s81
      %p83 = scmp.eq.s32.totalorder %s17, 0
      %p84 = por %p82, %p83
      %s85 = ssub.s32 %s18, %s30
      %s86 = ssub.s32 %s19, %s26
      %s87 = sor.u32 %s85, %s86
      %p88 = scmp.eq.s32.totalorder %s87, 0
      %s90 = sadd.s32 %s89, 1
      %s91 = scalar_select %p88, %s89, %s90
      %p94 = pneg %p88
      %p95 = scmp.eq.s32.totalorder %s11, 1
      %p96 = por %p94, %p95
      %p97 = scmp.ne.s32.totalorder %s89, %s92
      %p98 = scmp.eq.s32.totalorder %s11, 0
      %p99 = por %p97, %p98
      %p100 = scmp.ne.s32.totalorder %s89, %s92
      %p101 = scmp.eq.s32.totalorder %s16, 1
      %p102 = por %p100, %p101
      %p103 = scmp.ne.s32.totalorder %s92, %s93
      %p104 = scmp.eq.s32.totalorder %s16, 0
      %p105 = por %p103, %p104
      %p106 = scmp.ne.s32.totalorder %s92, %s93
      %p107 = scmp.eq.s32.totalorder %s17, 1
      %p108 = por %p106, %p107
      %p110 = scmp.ne.s32.totalorder %s93, %s109
      %p111 = scmp.eq.s32.totalorder %s17, 0
      %p112 = por %p110, %p111
      %p113 = scmp.le.s32.totalorder 1, %s11
      %p114 = scmp.lt.s32.totalorder %s11, 3
      %p115 = pnand %p113, %p114
      %p116 = pneg %p115
      // Predicated region
      $region9: #{tpu_custom_call.1} parent=5 // pred_check
        _
      $region10: #{tpu_custom_call.1} parent=5 // pred_check_branch
        %118 = sbr.rel (%p115) target = $region12
      $region11: #{tpu_custom_call.1} parent=5 // pred_region
        %s119 = ssub.s32 %s11, 1
        // Predicated region
        $region13: #{tpu_custom_call.1} parent=11 // pred_check
          %p120 = pneg %p77
        $region14: #{tpu_custom_call.1} parent=11 // pred_check_branch
          %122 = sbr.rel (%p120) target = $region16
        $region15: #{tpu_custom_call.1} parent=11 // pred_region
          %p123 = scmp.lt.s32.totalorder %s20, 0
          %s124 = scalar_select %p123, %s20, 0
          %s125 = smul.addr %s124, 8
          %s126 = scalar_lea.vmem %s1, %s125
        $region16: #{tpu_custom_call.1} parent=11 // pred_fallthru
          _
      $region12: #{tpu_custom_call.1} parent=5 // pred_fallthru
        _
      %p127 = scmp.lt.s32.totalorder %s11, 2
      // Predicated region
      $region17: #{tpu_custom_call.1} parent=5 // pred_check
        %p128 = pneg %p127
      $region18: #{tpu_custom_call.1} parent=5 // pred_check_branch
        %130 = sbr.rel (%p128) target = $region20
      $region19: #{tpu_custom_call.1} parent=5 // pred_region
        // Predicated region
        $region21: #{tpu_custom_call.1} parent=19 // pred_check
          %p131 = pneg %p45
        $region22: #{tpu_custom_call.1} parent=19 // pred_check_branch
          %133 = sbr.rel (%p131) target = $region24
        $region23: #{tpu_custom_call.1} parent=19 // pred_region
          %p134 = scmp.lt.s32.totalorder %s18, 0
          %s135 = scalar_select %p134, %s18, 0
          %p136 = scmp.lt.s32.totalorder %s19, 1
          %s137 = scalar_select %p136, %s19, 1
          %s138 = smul.addr %s135, 2
          %s139 = sadd.s32 %s137, %s138
          %s140 = smul.addr %s139, 8
          %s141 = scalar_lea.vmem %s0, %s140
        $region24: #{tpu_custom_call.1} parent=19 // pred_fallthru
          _
      $region20: #{tpu_custom_call.1} parent=5 // pred_fallthru
        _
      %p142 = scmp.le.s32.totalorder 1, %s11
      %p143 = scmp.lt.s32.totalorder %s11, 3
      %p144 = pnand %p142, %p143
      %p145 = pneg %p144
      // Predicated region
      $region25: #{tpu_custom_call.1} parent=5 // pred_check
        _
      $region26: #{tpu_custom_call.1} parent=5 // pred_check_branch
        %147 = sbr.rel (%p144) target = $region28
      $region27: #{tpu_custom_call.1} parent=5 // pred_region
        %s148 = ssub.s32 %s11, 1
        %p149 = scmp.lt.s32.totalorder %s20, 0
        %s150 = scalar_select %p149, %s20, 0
        %p151 = scmp.lt.s32.totalorder %s21, 1
        %s152 = scalar_select %p151, %s21, 1
        %s153 = smul.addr %s150, 2
        %s154 = sadd.s32 %s152, %s153
        %s155 = smul.addr %s154, 8
        %s156 = scalar_lea.vmem %s0, %s155
        %p157 = pneg %p51
        %p158 = pneg %p48
        %p159 = scmp.lt.s32.totalorder %s20, 0
        %s160 = scalar_select %p159, %s20, 0
        %s161 = smul.addr %s160, 8
        %s162 = scalar_lea.vmem %s1, %s161
        %p163 = pneg %p77
        %p164 = pneg %p74
        %p165 = pneg %p105
        %p166 = pneg %p102
        %s167 = sand.u32 %s92, 1
        %s168 = scalar_lea.sflag [#allocation3], %s167
        %s169 = sand.u32 %s92, 1
        %s170 = smul.addr %s169, 8
        %s171 = scalar_lea.vmem [#allocation2], %s170
        %p172 = scmp.lt.s32.totalorder %s20, 0
        %s173 = scalar_select %p172, %s20, 0
        %p174 = scmp.lt.s32.totalorder %s21, 1
        %s175 = scalar_select %p174, %s21, 1
        %s176 = smul.addr %s173, 2
        %s177 = sadd.s32 %s175, %s176
        %s178 = smul.addr %s177, 8
        %s179 = scalar_lea.vmem %s0, %s178
        %p180 = scmp.lt.s32.totalorder %s20, 0
        %s181 = scalar_select %p180, %s20, 0
        %s182 = smul.addr %s181, 8
        %s183 = scalar_lea.vmem %s1, %s182
        %v184 = vld [vmem:[%s179] sm:$0xff]
        %v185 = vld [vmem:[%s183] sm:$0xff]
        %s186 = scalar_lea.vmem %s183, 8
        %v187 = vld [vmem:[%s186] sm:$0xff]
        %s188 = scalar_lea.vmem %s183, 16
        %v189 = vld [vmem:[%s188] sm:$0xff]
        %191 = vset.pattern.permute.xlu0 0
        %192 = vperm.xlu0 %191, %v185
        %v193 = vpop.permute.xlu0 %192
        %v195 = vmul.f32 %v184, %v193
        %197 = vset.pattern.permute.xlu0 0
        %198 = vperm.xlu0 %197, %v187
        %v199 = vpop.permute.xlu0 %198
        %v201 = vadd.f32 %v195, %v199
        %vm202 = vcmp.ge.f32.partialorder %v201, 0.0
        %204 = vset.pattern.permute.xlu0 0
        %205 = vperm.xlu0 %204, %v189
        %v206 = vpop.permute.xlu0 %205
        %v208 = vmul.f32 %v206, %v201
        %v209 = vsel %vm202, %v201, %v208
        %210 = vst [vmem:[%s171] sm:$0xff] %v209
        %s211 = sand.u32 %s92, 1
        %s212 = scalar_lea.sflag [#allocation3], %s211
        %s213 = sand.u32 %s92, 1
        %s214 = smul.addr %s213, 8
        %s215 = scalar_lea.vmem [#allocation2], %s214
        // Predicated region
        $region29: #{tpu_custom_call.1} parent=27 // pred_check
          %p216 = pneg %p102
        $region30: #{tpu_custom_call.1} parent=27 // pred_check_branch
          %218 = sbr.rel (%p216) target = $region32
        $region31: #{tpu_custom_call.1} parent=27 // pred_region
          %220 = vsyncadd %s212, 0
          %s221 = smul.addr %s20, 2
          %s222 = sadd.s32 %s21, %s221
          %s223 = smul.addr %s222, 8
          %s224 = scalar_lea.hbm %s2, %s223
          %s226 = sshll.u32 %s215, 4
          %s227 = int_to_ptr.vmem [resolvable:$true] %s226
          %s228 = sshll.u32 %s224, 4
          %s229 = int_to_ptr.hbm [resolvable:$true] %s228
          %231 = dma.vmem_to_hbm [thread:$0]  %s227, 128, %s229, %s212
        $region32: #{tpu_custom_call.1} parent=27 // pred_fallthru
          _
      $region28: #{tpu_custom_call.1} parent=5 // pred_fallthru
        _
      %p232 = scmp.le.s32.totalorder 2, %s11
      // Predicated region
      $region33: #{tpu_custom_call.1} parent=5 // pred_check
        %p233 = pneg %p232
      $region34: #{tpu_custom_call.1} parent=5 // pred_check_branch
        %235 = sbr.rel (%p233) target = $region36
      $region35: #{tpu_custom_call.1} parent=5 // pred_region
        %s236 = ssub.s32 %s11, 2
        // Predicated region
        $region37: #{tpu_custom_call.1} parent=35 // pred_check
          %p237 = pneg %p108
        $region38: #{tpu_custom_call.1} parent=35 // pred_check_branch
          %239 = sbr.rel (%p237) target = $region40
        $region39: #{tpu_custom_call.1} parent=35 // pred_region
          %s240 = sand.u32 %s93, 1
          %s241 = scalar_lea.sflag [#allocation3], %s240
          %s242 = sand.u32 %s93, 1
          %s243 = smul.addr %s242, 8
          %s244 = scalar_lea.vmem [#allocation2], %s243
          %246 = dma.done %s241, 128
        $region40: #{tpu_custom_call.1} parent=35 // pred_fallthru
          _
      $region36: #{tpu_custom_call.1} parent=5 // pred_fallthru
        _
    $region6: #{tpu_custom_call.1} parent=1 // loop_footer
      %s15 = sadd.s32 1, %s11
    $region7: #{tpu_custom_call.1} parent=1 // loop_footer_branch
      %10 = sbr.rel target = $region3
    $region8: #{tpu_custom_call.1} parent=1 // loop_exit
      _
    %247 = vsyncpa [#allocation3], 1
    %s248 = scalar_lea.sflag [#allocation3], 1
    %249 = vsyncpa %s248, 1

</llo_original>
